<compile_context>
chip_gen: v6e
topology: v6e:2x2x1
jax: 0.10.0
libtpu: 0.0.40
codegen_flags: <defaults>
</compile_context>

<pallas_src>
import jax
import jax.numpy as jnp
import numpy as np
from jax.experimental import pallas as pl
from jax.experimental.pallas import tpu as pltpu  # noqa: F401  (kept for memory-space/params if scaled up)

# ----- small, shape-consistent configuration (model_d == vocab_size == D_MODEL) -----
N_VOCAB    = 50     # n_vocab
D_MODEL    = 32     # model_d == vocab_size (embedding dim)
N_POSITION = 16     # n_position
N_LAYERS   = 2      # num_layers
N_HEAD     = 4      # n_head
D_K        = 8      # d_k
D_V        = 8      # d_v
D_FFN      = 64     # ffn_d
B          = 2      # batch
S          = 8      # sequence length
BS         = B * S  # folded batch*sequence rows (16)
HS         = N_HEAD * BS   # packed score lanes (64)
EPS        = 1e-6


# ----------------------------- Pallas kernel --------------------------------
def encoder_kernel(x_ref, bias_ref, wa_ref, wf_ref, c_ref, o_ref):
    # x_ref    : (BS, D)      f32   embeddings + positional encoding (batch folded)
    # bias_ref : (BS, H*BS)   f32   additive attention bias, pre-tiled per head
    # wa_ref   : (4*D, D)     bf16  [Wq*scale ; Wk ; Wv ; Wo]
    # wf_ref   : (D+F, F)     bf16  [W1 ; W2 | zeros]
    # c_ref    : (112, F)     f32   rows 0:12 biases+LN params, 16:48 mask_kt, 48:112 mask_bd
    bf16 = jnp.bfloat16
    x = x_ref[...]
    bias = bias_ref[...]

    def prow(r, n=D_MODEL):                       # (1, n) parameter row (static slice of ref)
        return c_ref[r:r + 1, 0:n]

    def layer_norm(v, gr, br):
        mu = jnp.mean(v, axis=-1, keepdims=True)
        var = jnp.mean((v - mu) ** 2, axis=-1, keepdims=True)
        return (v - mu) * jax.lax.rsqrt(var + EPS) * prow(gr) + prow(br)

    # dropout == identity (eval); top-level Encoder LayerNorm
    xn = layer_norm(x, 6, 7)
    xn_bf = xn.astype(bf16)

    # fused per-head-concatenated projections (1/sqrt(d_k) already folded into Wq, bq)
    q = jnp.dot(xn_bf, wa_ref[0:D_MODEL, :],            preferred_element_type=jnp.float32) + prow(0)
    k = jnp.dot(xn_bf, wa_ref[D_MODEL:2 * D_MODEL, :],  preferred_element_type=jnp.float32) + prow(1)
    v = jnp.dot(xn_bf, wa_ref[2 * D_MODEL:3 * D_MODEL, :], preferred_element_type=jnp.float32) + prow(2)

    mask_kt = c_ref[16:16 + D_MODEL, :]            # (D, H*BS)  (r//D_K == c//BS)
    mask_bd = c_ref[48:48 + HS, 0:D_MODEL]         # (H*BS, D)  (r//BS  == c//D_V)

    # ---- head-packed attention: one (BS, H*BS) score slab for all heads -------------
    kt = jnp.transpose(k)                                                     # (D, BS), single XLU transpose
    kt_bd = (jnp.concatenate([kt] * N_HEAD, axis=1) * mask_kt).astype(bf16)   # block-diag K^T  (D, H*BS)
    s = jnp.dot(q.astype(bf16), kt_bd, preferred_element_type=jnp.float32) + bias      # (BS, H*BS)

    # shared per-row max across all head blocks == same constant per block -> softmax-invariant
    e = jnp.exp(s - jnp.max(s, axis=-1, keepdims=True))                       # (BS, H*BS) f32
    e_bf = e.astype(bf16)

    v_bd = (jnp.concatenate([v] * N_HEAD, axis=0) * mask_bd).astype(bf16)     # block-diag V  (H*BS, D)
    u = jnp.dot(e_bf, v_bd, preferred_element_type=jnp.float32)               # concat_h e_h @ V_h   (BS, D)
    den = jnp.dot(e_bf, mask_bd.astype(bf16), preferred_element_type=jnp.float32)  # per-head row sums, broadcast
    heads = u * pl.reciprocal(den, approx=True)                               # concat_h softmax_h @ V_h

    attn = jnp.dot(heads.astype(bf16), wa_ref[3 * D_MODEL:4 * D_MODEL, :],
                   preferred_element_type=jnp.float32) + prow(3)
    x1 = layer_norm(attn + xn, 8, 9)                                          # post-norm residual

    h1 = jnp.maximum(jnp.dot(x1.astype(bf16), wf_ref[0:D_MODEL, :],
                             preferred_element_type=jnp.float32) + prow(4, D_FFN), 0.0)
    ff = jnp.dot(h1.astype(bf16), wf_ref[D_MODEL:D_MODEL + D_FFN, 0:D_MODEL],
                 preferred_element_type=jnp.float32) + prow(5)
    o_ref[...] = layer_norm(ff + x1, 10, 11)


# ----------------------------- wrapper ---------------------------------------
def encoder_forward_pallas(x_emb, mask, p):
    """x_emb: (B, S, D) f32 ; mask: (B, 1, S) key-padding mask (1 keep, 0 masked)."""
    Bn, Sn, Dn = x_emb.shape
    x_fold = x_emb.reshape(Bn * Sn, Dn)

    # Additive attention bias (key padding + cross-batch block-diagonal), pre-tiled per head.
    key_keep = mask[:, 0, :].reshape(-1) > 0                    # (B*S,)
    batch_id = jnp.repeat(jnp.arange(Bn), Sn)
    same_batch = batch_id[:, None] == batch_id[None, :]
    attn_bias = jnp.where(same_batch & key_keep[None, :], 0.0, -1e9).astype(jnp.float32)  # (BS, BS)
    bias_packed = jnp.tile(attn_bias, (1, N_HEAD))                                        # (BS, H*BS)

    # Layers are NOT chained in the reference forward (every layer reads the same xn and the
    # output is overwritten) -> only the last layer's transform reaches the output.
    L = N_LAYERS - 1
    scale = 1.0 / np.sqrt(D_K)

    # bf16 weight slabs (MXU operands): attention (4*D, D) and FFN (D+F, F).
    wa = jnp.concatenate([p["wq"][L] * scale, p["wk"][L], p["wv"][L], p["wo"][L]],
                         axis=0).astype(jnp.bfloat16)                                     # (128, 32)
    w2_pad = jnp.concatenate([p["w2"][L], jnp.zeros((D_FFN, D_FFN - D_MODEL), jnp.float32)], axis=1)
    wf = jnp.concatenate([p["w1"][L], w2_pad], axis=0).astype(jnp.bfloat16)               # (96, 64)

    # f32 constants slab: biases + LN params (rows 0:11), block-diag masks (rows 16:48, 48:112).
    def pad64(vec):
        return jnp.concatenate([vec, jnp.zeros((D_FFN - vec.shape[0],), jnp.float32)])[None, :]

    prm = jnp.concatenate([
        pad64(p["bq"][L] * scale), pad64(p["bk"][L]), pad64(p["bv"][L]), pad64(p["bo"][L]),
        p["b1"][L][None, :], pad64(p["b2"][L]),
        pad64(p["ln0_g"]), pad64(p["ln0_b"]),
        pad64(p["ln1_g"][L]), pad64(p["ln1_b"][L]),
        pad64(p["ln2_g"][L]), pad64(p["ln2_b"][L]),
        jnp.zeros((4, D_FFN), jnp.float32),
    ], axis=0)                                                                            # (16, 64)

    hm = np.arange(HS) // BS                                                               # head id per packed lane/row
    mask_kt = (np.arange(D_MODEL)[:, None] // D_K == hm[None, :]).astype(np.float32)       # (32, 64)
    mask_bd = (hm[:, None] == np.arange(D_MODEL)[None, :] // D_V).astype(np.float32)       # (64, 32)
    mask_bd_pad = np.concatenate([mask_bd, np.zeros((HS, D_FFN - D_MODEL), np.float32)], axis=1)
    consts = jnp.concatenate([prm, jnp.asarray(mask_kt), jnp.asarray(mask_bd_pad)], axis=0)  # (112, 64)

    # Single invocation, no grid, everything VMEM-resident (default whole-array BlockSpecs).
    out = pl.pallas_call(
        encoder_kernel,
        out_shape=jax.ShapeDtypeStruct((Bn * Sn, Dn), jnp.float32),
    )(x_fold, bias_packed, wa, wf, consts)

    return out.reshape(Bn, Sn, Dn)


# ----------------------------- parameters / glue ------------------------------
def sinusoid_table(n_position, d):
    pos = np.arange(n_position, dtype=np.float64)[:, None]
    i = np.arange(d, dtype=np.float64)[None, :]
    angle = pos / np.power(10000.0, 2.0 * (i // 2) / d)
    table = np.zeros((n_position, d), dtype=np.float64)
    table[:, 0::2] = np.sin(angle[:, 0::2])
    table[:, 1::2] = np.cos(angle[:, 1::2])
    return jnp.asarray(table, dtype=jnp.float32)


def init_params(key):
    ks = jax.random.split(key, 20)
    sc = 0.05
    HK, HV = N_HEAD * D_K, N_HEAD * D_V

    def nrm(k, shape, s=sc):
        return s * jax.random.normal(k, shape, jnp.float32)

    emb = nrm(ks[0], (N_VOCAB, D_MODEL)).at[0].set(0.0)          # padding_idx=0
    return {
        "emb": emb,
        "pe": sinusoid_table(N_POSITION, D_MODEL),
        "ln0_g": 1.0 + nrm(ks[1], (D_MODEL,), 0.1),
        "ln0_b": nrm(ks[2], (D_MODEL,), 0.1),
        "wq": nrm(ks[3], (N_LAYERS, D_MODEL, HK)),
        "bq": nrm(ks[4], (N_LAYERS, HK)),
        "wk": nrm(ks[5], (N_LAYERS, D_MODEL, HK)),
        "bk": nrm(ks[6], (N_LAYERS, HK)),
        "wv": nrm(ks[7], (N_LAYERS, D_MODEL, HV)),
        "bv": nrm(ks[8], (N_LAYERS, HV)),
        "wo": nrm(ks[9], (N_LAYERS, HV, D_MODEL)),
        "bo": nrm(ks[10], (N_LAYERS, D_MODEL)),
        "ln1_g": 1.0 + nrm(ks[11], (N_LAYERS, D_MODEL), 0.1),
        "ln1_b": nrm(ks[12], (N_LAYERS, D_MODEL), 0.1),
        "w1": nrm(ks[13], (N_LAYERS, D_MODEL, D_FFN)),
        "b1": nrm(ks[14], (N_LAYERS, D_FFN)),
        "w2": nrm(ks[15], (N_LAYERS, D_FFN, D_MODEL)),
        "b2": nrm(ks[16], (N_LAYERS, D_MODEL)),
        "ln2_g": 1.0 + nrm(ks[17], (N_LAYERS, D_MODEL), 0.1),
        "ln2_b": nrm(ks[18], (N_LAYERS, D_MODEL), 0.1),
    }


def reference_forward(x_emb, mask, p):
    """Pure-JAX f32 reference mirroring the (un-chained-layer) PyTorch forward."""
    def ln(x, g, b):
        mu = x.mean(-1, keepdims=True)
        var = ((x - mu) ** 2).mean(-1, keepdims=True)
        return (x - mu) * jax.lax.rsqrt(var + EPS) * g + b

    xn = ln(x_emb, p["ln0_g"], p["ln0_b"])
    out = xn
    for l in range(N_LAYERS):
        q_all = xn @ p["wq"][l] + p["bq"][l]
        k_all = xn @ p["wk"][l] + p["bk"][l]
        v_all = xn @ p["wv"][l] + p["bv"][l]
        heads = []
        for h in range(N_HEAD):
            qh = q_all[..., h * D_K:(h + 1) * D_K]
            kh = k_all[..., h * D_K:(h + 1) * D_K]
            vh = v_all[..., h * D_V:(h + 1) * D_V]
            s = jnp.einsum("bqd,bkd->bqk", qh, kh) / (D_K ** 0.5)
            s = jnp.where(mask > 0, s, -1e9)
            a = jax.nn.softmax(s, axis=-1)
            heads.append(jnp.einsum("bqk,bkd->bqd", a, vh))
        attn = jnp.concatenate(heads, axis=-1) @ p["wo"][l] + p["bo"][l]
        x1 = ln(attn + xn, p["ln1_g"][l], p["ln1_b"][l])
        ff = jnp.maximum(x1 @ p["w1"][l] + p["b1"][l], 0.0)
        ff = ff @ p["w2"][l] + p["b2"][l]
        out = ln(ff + x1, p["ln2_g"][l], p["ln2_b"][l])
    return out


if __name__ == "__main__":
    key = jax.random.PRNGKey(0)
    k_tok, k_par = jax.random.split(key)

    params = init_params(k_par)

    # token ids (0 is the padding id) and key-padding mask
    tokens = jax.random.randint(k_tok, (B, S), 0, N_VOCAB)            # (B, S) int32
    mask = (tokens != 0).astype(jnp.float32)[:, None, :]              # (B, 1, S)

    # glue: embedding gather + positional encoding (dropout == identity)
    x_emb = params["emb"][tokens] + params["pe"][:S][None, :, :]      # (B, S, D)

    out = encoder_forward_pallas(x_emb, mask, params)
    out = jax.block_until_ready(out)

    ref = reference_forward(x_emb, mask, params)
    # bf16 MXU operands + approx reciprocal -> slightly looser tolerance than pure-f32
    np.testing.assert_allclose(np.asarray(out), np.asarray(ref), rtol=2e-2, atol=2e-2)

    print("KERNEL_OK")
</pallas_src>

<mosaic_0001>
module attributes {stable_mosaic.version = 11 : i64} {
  func.func @encoder_kernel(%arg0: memref<16x32xf32, #tpu.memory_space<vmem>>, %arg1: memref<16x64xf32, #tpu.memory_space<vmem>>, %arg2: memref<128x32xbf16, #tpu.memory_space<vmem>>, %arg3: memref<96x64xbf16, #tpu.memory_space<vmem>>, %arg4: memref<112x64xf32, #tpu.memory_space<vmem>>, %arg5: memref<16x32xf32, #tpu.memory_space<vmem>>) attributes {dimension_semantics = [], scalar_prefetch = 0 : i64, scratch_operands = 0 : i64, tpu.core_type = #tpu.core_type<tc>} {
    %c0 = arith.constant 0 : index
    %c0_0 = arith.constant 0 : index
    %0 = vector.load %arg0[%c0, %c0_0] : memref<16x32xf32, #tpu.memory_space<vmem>>, vector<16x32xf32>
    %c0_1 = arith.constant 0 : index
    %c0_2 = arith.constant 0 : index
    %1 = vector.load %arg1[%c0_1, %c0_2] : memref<16x64xf32, #tpu.memory_space<vmem>>, vector<16x64xf32>
    %cst = arith.constant dense<0.000000e+00> : vector<16xf32>
    %2 = vector.multi_reduction <add>, %0, %cst [1] : vector<16x32xf32> to vector<16xf32>
    %3 = vector.shape_cast %2 : vector<16xf32> to vector<16x1xf32>
    %cst_3 = arith.constant 3.200000e+01 : f32
    %4 = vector.broadcast %cst_3 : f32 to vector<16x1xf32>
    %5 = arith.divf %3, %4 : vector<16x1xf32>
    %6 = vector.broadcast %5 : vector<16x1xf32> to vector<16x32xf32>
    %7 = arith.subf %0, %6 : vector<16x32xf32>
    %8 = arith.mulf %7, %7 : vector<16x32xf32>
    %cst_4 = arith.constant dense<0.000000e+00> : vector<16xf32>
    %9 = vector.multi_reduction <add>, %8, %cst_4 [1] : vector<16x32xf32> to vector<16xf32>
    %10 = vector.shape_cast %9 : vector<16xf32> to vector<16x1xf32>
    %cst_5 = arith.constant 3.200000e+01 : f32
    %11 = vector.broadcast %cst_5 : f32 to vector<16x1xf32>
    %12 = arith.divf %10, %11 : vector<16x1xf32>
    %13 = vector.broadcast %5 : vector<16x1xf32> to vector<16x32xf32>
    %14 = arith.subf %0, %13 : vector<16x32xf32>
    %cst_6 = arith.constant 9.99999997E-7 : f32
    %15 = vector.broadcast %cst_6 : f32 to vector<16x1xf32>
    %16 = arith.addf %12, %15 : vector<16x1xf32>
    %17 = math.rsqrt %16 : vector<16x1xf32>
    %18 = vector.broadcast %17 : vector<16x1xf32> to vector<16x32xf32>
    %19 = arith.mulf %14, %18 : vector<16x32xf32>
    %c6 = arith.constant 6 : index
    %c0_7 = arith.constant 0 : index
    %20 = vector.load %arg4[%c6, %c0_7] : memref<112x64xf32, #tpu.memory_space<vmem>>, vector<1x32xf32>
    %21 = vector.broadcast %20 : vector<1x32xf32> to vector<16x32xf32>
    %22 = arith.mulf %19, %21 : vector<16x32xf32>
    %c7 = arith.constant 7 : index
    %c0_8 = arith.constant 0 : index
    %23 = vector.load %arg4[%c7, %c0_8] : memref<112x64xf32, #tpu.memory_space<vmem>>, vector<1x32xf32>
    %24 = vector.broadcast %23 : vector<1x32xf32> to vector<16x32xf32>
    %25 = arith.addf %22, %24 : vector<16x32xf32>
    %26 = arith.truncf %25 : vector<16x32xf32> to vector<16x32xbf16>
    %c0_9 = arith.constant 0 : index
    %c0_10 = arith.constant 0 : index
    %27 = vector.load %arg2[%c0_9, %c0_10] : memref<128x32xbf16, #tpu.memory_space<vmem>>, vector<32x32xbf16>
    %cst_11 = arith.constant dense<0.000000e+00> : vector<16x32xf32>
    %28 = tpu.matmul %26, %27, %cst_11 {dimension_numbers = #tpu.dot_dimension_numbers<[1], [0], [0], [1], [0, 0, 1, 1], [], []>} : vector<16x32xbf16>, vector<32x32xbf16>, vector<16x32xf32> -> vector<16x32xf32>
    %c0_12 = arith.constant 0 : index
    %c0_13 = arith.constant 0 : index
    %29 = vector.load %arg4[%c0_12, %c0_13] : memref<112x64xf32, #tpu.memory_space<vmem>>, vector<1x32xf32>
    %30 = vector.broadcast %29 : vector<1x32xf32> to vector<16x32xf32>
    %31 = arith.addf %28, %30 : vector<16x32xf32>
    %c32 = arith.constant 32 : index
    %c0_14 = arith.constant 0 : index
    %32 = vector.load %arg2[%c32, %c0_14] : memref<128x32xbf16, #tpu.memory_space<vmem>>, vector<32x32xbf16>
    %cst_15 = arith.constant dense<0.000000e+00> : vector<16x32xf32>
    %33 = tpu.matmul %26, %32, %cst_15 {dimension_numbers = #tpu.dot_dimension_numbers<[1], [0], [0], [1], [0, 0, 1, 1], [], []>} : vector<16x32xbf16>, vector<32x32xbf16>, vector<16x32xf32> -> vector<16x32xf32>
    %c1 = arith.constant 1 : index
    %c0_16 = arith.constant 0 : index
    %34 = vector.load %arg4[%c1, %c0_16] : memref<112x64xf32, #tpu.memory_space<vmem>>, vector<1x32xf32>
    %35 = vector.broadcast %34 : vector<1x32xf32> to vector<16x32xf32>
    %36 = arith.addf %33, %35 : vector<16x32xf32>
    %c64 = arith.constant 64 : index
    %c0_17 = arith.constant 0 : index
    %37 = vector.load %arg2[%c64, %c0_17] : memref<128x32xbf16, #tpu.memory_space<vmem>>, vector<32x32xbf16>
    %cst_18 = arith.constant dense<0.000000e+00> : vector<16x32xf32>
    %38 = tpu.matmul %26, %37, %cst_18 {dimension_numbers = #tpu.dot_dimension_numbers<[1], [0], [0], [1], [0, 0, 1, 1], [], []>} : vector<16x32xbf16>, vector<32x32xbf16>, vector<16x32xf32> -> vector<16x32xf32>
    %c2 = arith.constant 2 : index
    %c0_19 = arith.constant 0 : index
    %39 = vector.load %arg4[%c2, %c0_19] : memref<112x64xf32, #tpu.memory_space<vmem>>, vector<1x32xf32>
    %40 = vector.broadcast %39 : vector<1x32xf32> to vector<16x32xf32>
    %41 = arith.addf %38, %40 : vector<16x32xf32>
    %c16 = arith.constant 16 : index
    %c0_20 = arith.constant 0 : index
    %42 = vector.load %arg4[%c16, %c0_20] : memref<112x64xf32, #tpu.memory_space<vmem>>, vector<32x64xf32>
    %c48 = arith.constant 48 : index
    %c0_21 = arith.constant 0 : index
    %43 = vector.load %arg4[%c48, %c0_21] : memref<112x64xf32, #tpu.memory_space<vmem>>, vector<64x32xf32>
    %44 = tpu.transpose %36, [1, 0] : vector<16x32xf32> -> vector<32x16xf32>
    %45 = tpu.concatenate %44, %44, %44, %44 in 1 : vector<32x16xf32>, vector<32x16xf32>, vector<32x16xf32>, vector<32x16xf32> -> vector<32x64xf32>
    %46 = arith.mulf %45, %42 : vector<32x64xf32>
    %47 = arith.truncf %46 : vector<32x64xf32> to vector<32x64xbf16>
    %48 = arith.truncf %31 : vector<16x32xf32> to vector<16x32xbf16>
    %cst_22 = arith.constant dense<0.000000e+00> : vector<16x64xf32>
    %49 = tpu.matmul %48, %47, %cst_22 {dimension_numbers = #tpu.dot_dimension_numbers<[1], [0], [0], [1], [0, 0, 1, 1], [], []>} : vector<16x32xbf16>, vector<32x64xbf16>, vector<16x64xf32> -> vector<16x64xf32>
    %50 = arith.addf %49, %1 : vector<16x64xf32>
    %cst_23 = arith.constant dense<0xFF800000> : vector<16xf32>
    %51 = vector.multi_reduction <maximumf>, %50, %cst_23 [1] : vector<16x64xf32> to vector<16xf32>
    %52 = vector.shape_cast %51 : vector<16xf32> to vector<16x1xf32>
    %53 = vector.broadcast %52 : vector<16x1xf32> to vector<16x64xf32>
    %54 = arith.subf %50, %53 : vector<16x64xf32>
    %55 = math.exp %54 : vector<16x64xf32>
    %56 = arith.truncf %55 : vector<16x64xf32> to vector<16x64xbf16>
    %57 = tpu.concatenate %41, %41, %41, %41 in 0 : vector<16x32xf32>, vector<16x32xf32>, vector<16x32xf32>, vector<16x32xf32> -> vector<64x32xf32>
    %58 = arith.mulf %57, %43 : vector<64x32xf32>
    %59 = arith.truncf %58 : vector<64x32xf32> to vector<64x32xbf16>
    %cst_24 = arith.constant dense<0.000000e+00> : vector<16x32xf32>
    %60 = tpu.matmul %56, %59, %cst_24 {dimension_numbers = #tpu.dot_dimension_numbers<[1], [0], [0], [1], [0, 0, 1, 1], [], []>} : vector<16x64xbf16>, vector<64x32xbf16>, vector<16x32xf32> -> vector<16x32xf32>
    %61 = arith.truncf %43 : vector<64x32xf32> to vector<64x32xbf16>
    %cst_25 = arith.constant dense<0.000000e+00> : vector<16x32xf32>
    %62 = tpu.matmul %56, %61, %cst_25 {dimension_numbers = #tpu.dot_dimension_numbers<[1], [0], [0], [1], [0, 0, 1, 1], [], []>} : vector<16x64xbf16>, vector<64x32xbf16>, vector<16x32xf32> -> vector<16x32xf32>
    %63 = tpu.reciprocal %62 {approx = true} : vector<16x32xf32> -> vector<16x32xf32>
    %64 = arith.mulf %60, %63 : vector<16x32xf32>
    %65 = arith.truncf %64 : vector<16x32xf32> to vector<16x32xbf16>
    %c96 = arith.constant 96 : index
    %c0_26 = arith.constant 0 : index
    %66 = vector.load %arg2[%c96, %c0_26] : memref<128x32xbf16, #tpu.memory_space<vmem>>, vector<32x32xbf16>
    %cst_27 = arith.constant dense<0.000000e+00> : vector<16x32xf32>
    %67 = tpu.matmul %65, %66, %cst_27 {dimension_numbers = #tpu.dot_dimension_numbers<[1], [0], [0], [1], [0, 0, 1, 1], [], []>} : vector<16x32xbf16>, vector<32x32xbf16>, vector<16x32xf32> -> vector<16x32xf32>
    %c3 = arith.constant 3 : index
    %c0_28 = arith.constant 0 : index
    %68 = vector.load %arg4[%c3, %c0_28] : memref<112x64xf32, #tpu.memory_space<vmem>>, vector<1x32xf32>
    %69 = vector.broadcast %68 : vector<1x32xf32> to vector<16x32xf32>
    %70 = arith.addf %67, %69 : vector<16x32xf32>
    %71 = arith.addf %70, %25 : vector<16x32xf32>
    %cst_29 = arith.constant dense<0.000000e+00> : vector<16xf32>
    %72 = vector.multi_reduction <add>, %71, %cst_29 [1] : vector<16x32xf32> to vector<16xf32>
    %73 = vector.shape_cast %72 : vector<16xf32> to vector<16x1xf32>
    %cst_30 = arith.constant 3.200000e+01 : f32
    %74 = vector.broadcast %cst_30 : f32 to vector<16x1xf32>
    %75 = arith.divf %73, %74 : vector<16x1xf32>
    %76 = vector.broadcast %75 : vector<16x1xf32> to vector<16x32xf32>
    %77 = arith.subf %71, %76 : vector<16x32xf32>
    %78 = arith.mulf %77, %77 : vector<16x32xf32>
    %cst_31 = arith.constant dense<0.000000e+00> : vector<16xf32>
    %79 = vector.multi_reduction <add>, %78, %cst_31 [1] : vector<16x32xf32> to vector<16xf32>
    %80 = vector.shape_cast %79 : vector<16xf32> to vector<16x1xf32>
    %cst_32 = arith.constant 3.200000e+01 : f32
    %81 = vector.broadcast %cst_32 : f32 to vector<16x1xf32>
    %82 = arith.divf %80, %81 : vector<16x1xf32>
    %83 = vector.broadcast %75 : vector<16x1xf32> to vector<16x32xf32>
    %84 = arith.subf %71, %83 : vector<16x32xf32>
    %cst_33 = arith.constant 9.99999997E-7 : f32
    %85 = vector.broadcast %cst_33 : f32 to vector<16x1xf32>
    %86 = arith.addf %82, %85 : vector<16x1xf32>
    %87 = math.rsqrt %86 : vector<16x1xf32>
    %88 = vector.broadcast %87 : vector<16x1xf32> to vector<16x32xf32>
    %89 = arith.mulf %84, %88 : vector<16x32xf32>
    %c8 = arith.constant 8 : index
    %c0_34 = arith.constant 0 : index
    %90 = vector.load %arg4[%c8, %c0_34] : memref<112x64xf32, #tpu.memory_space<vmem>>, vector<1x32xf32>
    %91 = vector.broadcast %90 : vector<1x32xf32> to vector<16x32xf32>
    %92 = arith.mulf %89, %91 : vector<16x32xf32>
    %c9 = arith.constant 9 : index
    %c0_35 = arith.constant 0 : index
    %93 = vector.load %arg4[%c9, %c0_35] : memref<112x64xf32, #tpu.memory_space<vmem>>, vector<1x32xf32>
    %94 = vector.broadcast %93 : vector<1x32xf32> to vector<16x32xf32>
    %95 = arith.addf %92, %94 : vector<16x32xf32>
    %96 = arith.truncf %95 : vector<16x32xf32> to vector<16x32xbf16>
    %c0_36 = arith.constant 0 : index
    %c0_37 = arith.constant 0 : index
    %97 = vector.load %arg3[%c0_36, %c0_37] : memref<96x64xbf16, #tpu.memory_space<vmem>>, vector<32x64xbf16>
    %cst_38 = arith.constant dense<0.000000e+00> : vector<16x64xf32>
    %98 = tpu.matmul %96, %97, %cst_38 {dimension_numbers = #tpu.dot_dimension_numbers<[1], [0], [0], [1], [0, 0, 1, 1], [], []>} : vector<16x32xbf16>, vector<32x64xbf16>, vector<16x64xf32> -> vector<16x64xf32>
    %c4 = arith.constant 4 : index
    %c0_39 = arith.constant 0 : index
    %99 = vector.load %arg4[%c4, %c0_39] : memref<112x64xf32, #tpu.memory_space<vmem>>, vector<1x64xf32>
    %100 = vector.broadcast %99 : vector<1x64xf32> to vector<16x64xf32>
    %101 = arith.addf %98, %100 : vector<16x64xf32>
    %cst_40 = arith.constant 0.000000e+00 : f32
    %102 = vector.broadcast %cst_40 : f32 to vector<16x64xf32>
    %103 = arith.maximumf %101, %102 : vector<16x64xf32>
    %104 = arith.truncf %103 : vector<16x64xf32> to vector<16x64xbf16>
    %c32_41 = arith.constant 32 : index
    %c0_42 = arith.constant 0 : index
    %105 = vector.load %arg3[%c32_41, %c0_42] : memref<96x64xbf16, #tpu.memory_space<vmem>>, vector<64x32xbf16>
    %cst_43 = arith.constant dense<0.000000e+00> : vector<16x32xf32>
    %106 = tpu.matmul %104, %105, %cst_43 {dimension_numbers = #tpu.dot_dimension_numbers<[1], [0], [0], [1], [0, 0, 1, 1], [], []>} : vector<16x64xbf16>, vector<64x32xbf16>, vector<16x32xf32> -> vector<16x32xf32>
    %c5 = arith.constant 5 : index
    %c0_44 = arith.constant 0 : index
    %107 = vector.load %arg4[%c5, %c0_44] : memref<112x64xf32, #tpu.memory_space<vmem>>, vector<1x32xf32>
    %108 = vector.broadcast %107 : vector<1x32xf32> to vector<16x32xf32>
    %109 = arith.addf %106, %108 : vector<16x32xf32>
    %110 = arith.addf %109, %95 : vector<16x32xf32>
    %cst_45 = arith.constant dense<0.000000e+00> : vector<16xf32>
    %111 = vector.multi_reduction <add>, %110, %cst_45 [1] : vector<16x32xf32> to vector<16xf32>
    %112 = vector.shape_cast %111 : vector<16xf32> to vector<16x1xf32>
    %cst_46 = arith.constant 3.200000e+01 : f32
    %113 = vector.broadcast %cst_46 : f32 to vector<16x1xf32>
    %114 = arith.divf %112, %113 : vector<16x1xf32>
    %115 = vector.broadcast %114 : vector<16x1xf32> to vector<16x32xf32>
    %116 = arith.subf %110, %115 : vector<16x32xf32>
    %117 = arith.mulf %116, %116 : vector<16x32xf32>
    %cst_47 = arith.constant dense<0.000000e+00> : vector<16xf32>
    %118 = vector.multi_reduction <add>, %117, %cst_47 [1] : vector<16x32xf32> to vector<16xf32>
    %119 = vector.shape_cast %118 : vector<16xf32> to vector<16x1xf32>
    %cst_48 = arith.constant 3.200000e+01 : f32
    %120 = vector.broadcast %cst_48 : f32 to vector<16x1xf32>
    %121 = arith.divf %119, %120 : vector<16x1xf32>
    %122 = vector.broadcast %114 : vector<16x1xf32> to vector<16x32xf32>
    %123 = arith.subf %110, %122 : vector<16x32xf32>
    %cst_49 = arith.constant 9.99999997E-7 : f32
    %124 = vector.broadcast %cst_49 : f32 to vector<16x1xf32>
    %125 = arith.addf %121, %124 : vector<16x1xf32>
    %126 = math.rsqrt %125 : vector<16x1xf32>
    %127 = vector.broadcast %126 : vector<16x1xf32> to vector<16x32xf32>
    %128 = arith.mulf %123, %127 : vector<16x32xf32>
    %c10 = arith.constant 10 : index
    %c0_50 = arith.constant 0 : index
    %129 = vector.load %arg4[%c10, %c0_50] : memref<112x64xf32, #tpu.memory_space<vmem>>, vector<1x32xf32>
    %130 = vector.broadcast %129 : vector<1x32xf32> to vector<16x32xf32>
    %131 = arith.mulf %128, %130 : vector<16x32xf32>
    %c11 = arith.constant 11 : index
    %c0_51 = arith.constant 0 : index
    %132 = vector.load %arg4[%c11, %c0_51] : memref<112x64xf32, #tpu.memory_space<vmem>>, vector<1x32xf32>
    %133 = vector.broadcast %132 : vector<1x32xf32> to vector<16x32xf32>
    %134 = arith.addf %131, %133 : vector<16x32xf32>
    %c0_52 = arith.constant 0 : index
    %c0_53 = arith.constant 0 : index
    %135 = vector.load %arg5[%c0_52, %c0_53] : memref<16x32xf32, #tpu.memory_space<vmem>>, vector<16x32xf32>
    tpu.vector_store %arg5[%c0_52, %c0_53], %134 {strides = array<i32>} : memref<16x32xf32, #tpu.memory_space<vmem>>, vector<16x32xf32>,
    return
  }
}

</mosaic_0001>

<llo_original>
// kernel: tpu_custom_call.1
$region0: #{tpu_custom_call.1}
  #allocation0 [shape = 'u32[]', space=smem, size = 0x4, offset = 0x4, fixed_abs, tag = 'smem constant byte address 0x4 - core index']
  #allocation1 [shape = 'u32[144,128]{1,0:T(1,128)}', space=vmem, size = 0x12000, scoped, tag = 'internal scratch']
  %s0 = inlined_call_operand.vmem [shape: f32[16,32], index: 0, kind: input, shape index: {}]
  %s1 = inlined_call_operand.vmem [shape: f32[16,64], index: 1, kind: input, shape index: {}]
  %s2 = inlined_call_operand.vmem [shape: bf16[128,32], index: 2, kind: input, shape index: {}]
  %s3 = inlined_call_operand.vmem [shape: bf16[96,64], index: 3, kind: input, shape index: {}]
  %s4 = inlined_call_operand.vmem [shape: f32[112,64], index: 4, kind: input, shape index: {}]
  %s5 = inlined_call_operand.hbm [shape: f32[16,32], index: 5, kind: output, shape index: {}]
  %s6 = sld [smem:[#allocation0]]
  $region30: #{tpu_custom_call.1} parent=0
    _
  %s8 = ssub.s32 1, %s6
  %s9 = scalar_select 0, %s8, %s6
  $region1: #{tpu_custom_call.1} parent=0
    #allocation2 [shape = 'u8[8192]{0}', space=vmem, size = 0x2000, scoped, tag = 'output window, operand 0, single buffered']
    #allocation3 [shape = 's32[1]{0}', space=sflag, size = 0x4, scoped, tag = 'scoped memory for tpu_custom_call.1']
    %10 = vsyncpa [#allocation3], 0
    // Predicated region
    $region2: #{tpu_custom_call.1} parent=1 // pred_check
      _
    $region3: #{tpu_custom_call.1} parent=1 // pred_check_branch
      %12 = sbr.rel (0) target = $region5
    $region4: #{tpu_custom_call.1} parent=1 // pred_region
      _
    $region5: #{tpu_custom_call.1} parent=1 // pred_fallthru
      _
    // Predicated region
    $region6: #{tpu_custom_call.1} parent=1 // pred_check
      _
    $region7: #{tpu_custom_call.1} parent=1 // pred_check_branch
      %14 = sbr.rel (0) target = $region9
    $region8: #{tpu_custom_call.1} parent=1 // pred_region
      _
    $region9: #{tpu_custom_call.1} parent=1 // pred_fallthru
      _
    // Predicated region
    $region10: #{tpu_custom_call.1} parent=1 // pred_check
      _
    $region11: #{tpu_custom_call.1} parent=1 // pred_check_branch
      %16 = sbr.rel (0) target = $region13
    $region12: #{tpu_custom_call.1} parent=1 // pred_region
      _
    $region13: #{tpu_custom_call.1} parent=1 // pred_fallthru
      _
    // Predicated region
    $region14: #{tpu_custom_call.1} parent=1 // pred_check
      _
    $region15: #{tpu_custom_call.1} parent=1 // pred_check_branch
      %18 = sbr.rel (0) target = $region17
    $region16: #{tpu_custom_call.1} parent=1 // pred_region
      _
    $region17: #{tpu_custom_call.1} parent=1 // pred_fallthru
      _
    // Predicated region
    $region18: #{tpu_custom_call.1} parent=1 // pred_check
      _
    $region19: #{tpu_custom_call.1} parent=1 // pred_check_branch
      %20 = sbr.rel (0) target = $region21
    $region20: #{tpu_custom_call.1} parent=1 // pred_region
      _
    $region21: #{tpu_custom_call.1} parent=1 // pred_fallthru
      _
    %v22 = vld [vmem:[%s0] sm:$0xff]
    %v23 = vld [vmem:[%s0 + $0x8] sm:$0xff]
    %v24 = vld [vmem:[%s1] sm:$0xff]
    %v25 = vld [vmem:[%s1 + $0x8] sm:$0xff]
    %vm26 = vcmask 261120
    %v27 = vsel %vm26, %v22, 0.0
    %28 = vadd.xlane.f32.xlu0 %v27
    %v29 = vpop.xlane.xlu0 %28
    %v30 = vsel %vm26, %v23, 0.0
    %31 = vadd.xlane.f32.xlu0 %v30
    %v32 = vpop.xlane.xlu0 %31
    %v33 = vrcp.pop 32.0
    %v34 = vmul.f32 %v29, %v33
    %v35 = vmul.f32 %v32, %v33
    %v36 = vsub.f32 %v22, %v34
    %v37 = vsub.f32 %v23, %v35
    %v38 = vmul.f32 %v36, %v36
    %v39 = vmul.f32 %v37, %v37
    %v40 = vsel %vm26, %v38, 0.0
    %41 = vadd.xlane.f32.xlu0 %v40
    %v42 = vpop.xlane.xlu0 %41
    %v43 = vsel %vm26, %v39, 0.0
    %44 = vadd.xlane.f32.xlu0 %v43
    %v45 = vpop.xlane.xlu0 %44
    %v46 = vmul.f32 %v42, %v33
    %v47 = vmul.f32 %v45, %v33
    %v48 = vadd.f32 %v46, 1e-06
    %v49 = vadd.f32 %v47, 1e-06
    %v50 = vrsqrt.pop %v48
    %v51 = vrsqrt.pop %v49
    %v52 = vmul.f32 %v36, %v50
    %v53 = vmul.f32 %v37, %v51
    %v54 = vld [vmem:[%s4 + $0x6] sm:$0x1]
    %v55 = vlaneseq
    %v56 = vshrl.u32 %v55, 7
    %v57 = vsub.s32 0, %v56
    %v58 = vrot.slane %v54, %v57
    %v59 = vmul.f32 %v52, %v58
    %v60 = vmul.f32 %v53, %v58
    %v61 = vld [vmem:[%s4 + $0x7] sm:$0x1]
    %v62 = vlaneseq
    %v63 = vshrl.u32 %v62, 7
    %v64 = vsub.s32 0, %v63
    %v65 = vrot.slane %v61, %v64
    %v66 = vadd.f32 %v59, %v65
    %v67 = vadd.f32 %v60, %v65
    %v68 = vpack.c.bf16 %v67, %v66
    %v69 = vld [vmem:[%s2] sm:$0xf]
    %v70 = vld [vmem:[%s2 + $0x4] sm:$0xf]
    %v71 = vld [vmem:[%s2 + $0x8] sm:$0xf]
    %v72 = vld [vmem:[%s2 + $0xc] sm:$0xf]
    %v73 = vld [vmem:[%s4] sm:$0x1]
    %v74 = vlaneseq
    %v75 = vshrl.u32 %v74, 7
    %v76 = vsub.s32 0, %v75
    %v77 = vrot.slane %v73, %v76
    %v82 = vunpack.c.l.b16 %v69
    %v83 = vunpack.c.l.b16 %v70
    %v84 = vunpack.c.l.b16 %v71
    %v85 = vunpack.c.l.b16 %v72
    %v86 = vpack.c.b16 %v83, %v82
    %v87 = vpack.c.b16 %v85, %v84
    %v91 = vsel %vm26, %v68, 0
    %93 = vmatprep.subr.bf16.mxu0 0
    %94 = vmatpush1.bf16.msra.mxu0 0
    %95 = vmatprep.subr.bf16.mxu0 0
    %96 = vmatpush1.bf16.msra.mxu0 0
    %97 = vmatprep.subr.bf16.mxu0 0
    %98 = vmatpush1.bf16.msra.mxu0 0
    %99 = vmatprep.subr.bf16.mxu0 0
    %100 = vmatpush1.bf16.msra.mxu0 0
    %101 = vmatprep.subr.bf16.mxu0 0
    %102 = vmatpush1.bf16.msra.mxu0 0
    %103 = vmatprep.subr.bf16.mxu0 0
    %104 = vmatpush1.bf16.msra.mxu0 0
    %105 = vmatprep.subr.bf16.mxu0 0
    %106 = vmatpush1.bf16.msra.mxu0 %v87
    %107 = vmatprep.subr.bf16.mxu0 0
    %108 = vmatpush1.bf16.msra.mxu0 %v86
    %109 = vmatprep.subr.bf16.mxu0 0
    %110 = vmatpush2.bf16.msra.mxu0 0
    %111 = vmatprep.subr.bf16.mxu0 0
    %112 = vmatpush2.bf16.msra.mxu0 0
    %113 = vmatprep.subr.bf16.mxu0 0
    %114 = vmatpush2.bf16.msra.mxu0 0
    %115 = vmatprep.subr.bf16.mxu0 0
    %116 = vmatpush2.bf16.msra.mxu0 0
    %117 = vmatprep.subr.bf16.mxu0 0
    %118 = vmatpush2.bf16.msra.mxu0 0
    %119 = vmatprep.subr.bf16.mxu0 0
    %120 = vmatpush2.bf16.msra.mxu0 0
    %121 = vmatprep.subr.bf16.mxu0 0
    %122 = vmatpush2.bf16.msra.mxu0 0
    %123 = vmatprep.subr.bf16.mxu0 0
    %124 = vmatpush2.bf16.msra.mxu0 0
    %125 = vmatprep.mubr.bf16.mxu0 0
    %126 = vmatmul.mubr.bf16.gmra.mxu0 %v91
    %v127 = vpop.f32.mrf.mxu0
    %v128 = vadd.f32 %v77, %v127
    %v129 = vpop.f32.mrf.mxu0
    %v130 = vpop.f32.mrf.mxu0
    %v131 = vadd.f32 %v77, %v130
    %v132 = vpop.f32.mrf.mxu0
    %133 = vdwg.mxu0
    %v134 = vld [vmem:[%s2 + $0x10] sm:$0xf]
    %v135 = vld [vmem:[%s2 + $0x14] sm:$0xf]
    %v136 = vld [vmem:[%s2 + $0x18] sm:$0xf]
    %v137 = vld [vmem:[%s2 + $0x1c] sm:$0xf]
    %v138 = vld [vmem:[%s4 + $0x1] sm:$0x1]
    %v139 = vlaneseq
    %v140 = vshrl.u32 %v139, 7
    %v141 = vsub.s32 0, %v140
    %v142 = vrot.slane %v138, %v141
    %v147 = vunpack.c.l.b16 %v134
    %v148 = vunpack.c.l.b16 %v135
    %v149 = vunpack.c.l.b16 %v136
    %v150 = vunpack.c.l.b16 %v137
    %v151 = vpack.c.b16 %v148, %v147
    %v152 = vpack.c.b16 %v150, %v149
    %155 = vmatprep.subr.bf16.mxu0 0
    %156 = vmatpush1.bf16.msra.mxu0 0
    %157 = vmatprep.subr.bf16.mxu0 0
    %158 = vmatpush1.bf16.msra.mxu0 0
    %159 = vmatprep.subr.bf16.mxu0 0
    %160 = vmatpush1.bf16.msra.mxu0 0
    %161 = vmatprep.subr.bf16.mxu0 0
    %162 = vmatpush1.bf16.msra.mxu0 0
    %163 = vmatprep.subr.bf16.mxu0 0
    %164 = vmatpush1.bf16.msra.mxu0 0
    %165 = vmatprep.subr.bf16.mxu0 0
    %166 = vmatpush1.bf16.msra.mxu0 0
    %167 = vmatprep.subr.bf16.mxu0 0
    %168 = vmatpush1.bf16.msra.mxu0 %v152
    %169 = vmatprep.subr.bf16.mxu0 0
    %170 = vmatpush1.bf16.msra.mxu0 %v151
    %171 = vmatprep.subr.bf16.mxu0 0
    %172 = vmatpush2.bf16.msra.mxu0 0
    %173 = vmatprep.subr.bf16.mxu0 0
    %174 = vmatpush2.bf16.msra.mxu0 0
    %175 = vmatprep.subr.bf16.mxu0 0
    %176 = vmatpush2.bf16.msra.mxu0 0
    %177 = vmatprep.subr.bf16.mxu0 0
    %178 = vmatpush2.bf16.msra.mxu0 0
    %179 = vmatprep.subr.bf16.mxu0 0
    %180 = vmatpush2.bf16.msra.mxu0 0
    %181 = vmatprep.subr.bf16.mxu0 0
    %182 = vmatpush2.bf16.msra.mxu0 0
    %183 = vmatprep.subr.bf16.mxu0 0
    %184 = vmatpush2.bf16.msra.mxu0 0
    %185 = vmatprep.subr.bf16.mxu0 0
    %186 = vmatpush2.bf16.msra.mxu0 0
    %187 = vmatprep.mubr.bf16.mxu0 0
    %188 = vmatmul.mubr.bf16.gmra.mxu0 %v91
    %v189 = vpop.f32.mrf.mxu0
    %v190 = vadd.f32 %v142, %v189
    %v191 = vpop.f32.mrf.mxu0
    %v192 = vpop.f32.mrf.mxu0
    %v193 = vadd.f32 %v142, %v192
    %v194 = vpop.f32.mrf.mxu0
    %195 = vdwg.mxu0
    %v196 = vld [vmem:[%s2 + $0x20] sm:$0xf]
    %v197 = vld [vmem:[%s2 + $0x24] sm:$0xf]
    %v198 = vld [vmem:[%s2 + $0x28] sm:$0xf]
    %v199 = vld [vmem:[%s2 + $0x2c] sm:$0xf]
    %v200 = vld [vmem:[%s4 + $0x2] sm:$0x1]
    %v201 = vlaneseq
    %v202 = vshrl.u32 %v201, 7
    %v203 = vsub.s32 0, %v202
    %v204 = vrot.slane %v200, %v203
    %v209 = vunpack.c.l.b16 %v196
    %v210 = vunpack.c.l.b16 %v197
    %v211 = vunpack.c.l.b16 %v198
    %v212 = vunpack.c.l.b16 %v199
    %v213 = vpack.c.b16 %v210, %v209
    %v214 = vpack.c.b16 %v212, %v211
    %217 = vmatprep.subr.bf16.mxu0 0
    %218 = vmatpush1.bf16.msra.mxu0 0
    %219 = vmatprep.subr.bf16.mxu0 0
    %220 = vmatpush1.bf16.msra.mxu0 0
    %221 = vmatprep.subr.bf16.mxu0 0
    %222 = vmatpush1.bf16.msra.mxu0 0
    %223 = vmatprep.subr.bf16.mxu0 0
    %224 = vmatpush1.bf16.msra.mxu0 0
    %225 = vmatprep.subr.bf16.mxu0 0
    %226 = vmatpush1.bf16.msra.mxu0 0
    %227 = vmatprep.subr.bf16.mxu0 0
    %228 = vmatpush1.bf16.msra.mxu0 0
    %229 = vmatprep.subr.bf16.mxu0 0
    %230 = vmatpush1.bf16.msra.mxu0 %v214
    %231 = vmatprep.subr.bf16.mxu0 0
    %232 = vmatpush1.bf16.msra.mxu0 %v213
    %233 = vmatprep.subr.bf16.mxu0 0
    %234 = vmatpush2.bf16.msra.mxu0 0
    %235 = vmatprep.subr.bf16.mxu0 0
    %236 = vmatpush2.bf16.msra.mxu0 0
    %237 = vmatprep.subr.bf16.mxu0 0
    %238 = vmatpush2.bf16.msra.mxu0 0
    %239 = vmatprep.subr.bf16.mxu0 0
    %240 = vmatpush2.bf16.msra.mxu0 0
    %241 = vmatprep.subr.bf16.mxu0 0
    %242 = vmatpush2.bf16.msra.mxu0 0
    %243 = vmatprep.subr.bf16.mxu0 0
    %244 = vmatpush2.bf16.msra.mxu0 0
    %245 = vmatprep.subr.bf16.mxu0 0
    %246 = vmatpush2.bf16.msra.mxu0 0
    %247 = vmatprep.subr.bf16.mxu0 0
    %248 = vmatpush2.bf16.msra.mxu0 0
    %249 = vmatprep.mubr.bf16.mxu0 0
    %250 = vmatmul.mubr.bf16.gmra.mxu0 %v91
    %v251 = vpop.f32.mrf.mxu0
    %v252 = vadd.f32 %v204, %v251
    %v253 = vpop.f32.mrf.mxu0
    %v254 = vpop.f32.mrf.mxu0
    %v255 = vadd.f32 %v204, %v254
    %v256 = vpop.f32.mrf.mxu0
    %257 = vdwg.mxu0
    %v258 = vld [vmem:[%s4 + $0x10] sm:$0xff]
    %v259 = vld [vmem:[%s4 + $0x18] sm:$0xff]
    %v260 = vld [vmem:[%s4 + $0x20] sm:$0xff]
    %v261 = vld [vmem:[%s4 + $0x28] sm:$0xff]
    %v262 = vld [vmem:[%s4 + $0x30] sm:$0xff]
    %v263 = vld [vmem:[%s4 + $0x38] sm:$0xff]
    %v264 = vld [vmem:[%s4 + $0x40] sm:$0xff]
    %v265 = vld [vmem:[%s4 + $0x48] sm:$0xff]
    %v266 = vld [vmem:[%s4 + $0x50] sm:$0xff]
    %v267 = vld [vmem:[%s4 + $0x58] sm:$0xff]
    %v268 = vld [vmem:[%s4 + $0x60] sm:$0xff]
    %v269 = vld [vmem:[%s4 + $0x68] sm:$0xff]
    %270 = vxpose.xlu0.b32.start [1/16] %v190, 128
    %271 = vxpose.xlu0.b32.cont [2/16] %v193, 128
    %272 = vxpose.xlu0.b32.cont [3/16] 0.0, 128
    %273 = vxpose.xlu0.b32.cont [4/16] 0.0, 128
    %274 = vxpose.xlu0.b32.cont [5/16] 0.0, 128
    %275 = vxpose.xlu0.b32.cont [6/16] 0.0, 128
    %276 = vxpose.xlu0.b32.cont [7/16] 0.0, 128
    %277 = vxpose.xlu0.b32.cont [8/16] 0.0, 128
    %278 = vxpose.xlu0.b32.cont [9/16] 0.0, 128
    %279 = vxpose.xlu0.b32.cont [10/16] 0.0, 128
    %280 = vxpose.xlu0.b32.cont [11/16] 0.0, 128
    %281 = vxpose.xlu0.b32.cont [12/16] 0.0, 128
    %282 = vxpose.xlu0.b32.cont [13/16] 0.0, 128
    %283 = vxpose.xlu0.b32.cont [14/16] 0.0, 128
    %284 = vxpose.xlu0.b32.cont [15/16] 0.0, 128
    %285 = vxpose.xlu0.b32.end [16/16] 0.0, 128
    %v286 = vpop.trf.xlu0
    %v287 = vpop.trf.xlu0
    %v288 = vpop.trf.xlu0
    %v289 = vpop.trf.xlu0
    %v290 = vpop.trf.xlu0
    %v291 = vpop.trf.xlu0
    %v292 = vpop.trf.xlu0
    %v293 = vpop.trf.xlu0
    %v294 = vpop.trf.xlu0
    %v295 = vpop.trf.xlu0
    %v296 = vpop.trf.xlu0
    %v297 = vpop.trf.xlu0
    %v298 = vpop.trf.xlu0
    %v299 = vpop.trf.xlu0
    %v300 = vpop.trf.xlu0
    %v301 = vpop.trf.xlu0
    %306 = vrot.lane.b32.xlu0 %v286, 16
    %v307 = vpop.permute.xlu0 %306
    %308 = vrot.lane.b32.xlu0 %v287, 16
    %v309 = vpop.permute.xlu0 %308
    %310 = vrot.lane.b32.xlu0 %v288, 16
    %v311 = vpop.permute.xlu0 %310
    %312 = vrot.lane.b32.xlu0 %v289, 16
    %v313 = vpop.permute.xlu0 %312
    %318 = vrot.lane.b32.xlu0 %v286, 32
    %v319 = vpop.permute.xlu0 %318
    %320 = vrot.lane.b32.xlu0 %v287, 32
    %v321 = vpop.permute.xlu0 %320
    %322 = vrot.lane.b32.xlu0 %v288, 32
    %v323 = vpop.permute.xlu0 %322
    %324 = vrot.lane.b32.xlu0 %v289, 32
    %v325 = vpop.permute.xlu0 %324
    %330 = vrot.lane.b32.xlu0 %v286, 48
    %v331 = vpop.permute.xlu0 %330
    %332 = vrot.lane.b32.xlu0 %v287, 48
    %v333 = vpop.permute.xlu0 %332
    %334 = vrot.lane.b32.xlu0 %v288, 48
    %v335 = vpop.permute.xlu0 %334
    %336 = vrot.lane.b32.xlu0 %v289, 48
    %v337 = vpop.permute.xlu0 %336
    %vm342 = vcmask 130048
    %v343 = vsel %vm342, %v286, %v307
    %v344 = vsel %vm342, %v287, %v309
    %v345 = vsel %vm342, %v288, %v311
    %v346 = vsel %vm342, %v289, %v313
    %v347 = vsel %vm26, %v343, %v319
    %v348 = vsel %vm26, %v344, %v321
    %v349 = vsel %vm26, %v345, %v323
    %v350 = vsel %vm26, %v346, %v325
    %vm351 = vcmask 392192
    %v352 = vsel %vm351, %v347, %v331
    %v353 = vsel %vm351, %v348, %v333
    %v354 = vsel %vm351, %v349, %v335
    %v355 = vsel %vm351, %v350, %v337
    %v356 = vmul.f32 %v352, %v258
    %v357 = vmul.f32 %v353, %v259
    %v358 = vmul.f32 %v354, %v260
    %v359 = vmul.f32 %v355, %v261
    %v360 = vpack.c.bf16 %v357, %v356
    %v361 = vpack.c.bf16 %v359, %v358
    %v362 = vpack.c.bf16 %v131, %v128
    %v364 = vsel %vm26, %v362, 0
    %366 = vmatprep.subr.bf16.mxu0 0
    %367 = vmatpush1.bf16.msra.mxu0 0
    %368 = vmatprep.subr.bf16.mxu0 0
    %369 = vmatpush1.bf16.msra.mxu0 0
    %370 = vmatprep.subr.bf16.mxu0 0
    %371 = vmatpush1.bf16.msra.mxu0 0
    %372 = vmatprep.subr.bf16.mxu0 0
    %373 = vmatpush1.bf16.msra.mxu0 0
    %374 = vmatprep.subr.bf16.mxu0 0
    %375 = vmatpush1.bf16.msra.mxu0 0
    %376 = vmatprep.subr.bf16.mxu0 0
    %377 = vmatpush1.bf16.msra.mxu0 0
    %378 = vmatprep.subr.bf16.mxu0 0
    %379 = vmatpush1.bf16.msra.mxu0 %v361
    %380 = vmatprep.subr.bf16.mxu0 0
    %381 = vmatpush1.bf16.msra.mxu0 %v360
    %382 = vmatprep.subr.bf16.mxu0 0
    %383 = vmatpush2.bf16.msra.mxu0 0
    %384 = vmatprep.subr.bf16.mxu0 0
    %385 = vmatpush2.bf16.msra.mxu0 0
    %386 = vmatprep.subr.bf16.mxu0 0
    %387 = vmatpush2.bf16.msra.mxu0 0
    %388 = vmatprep.subr.bf16.mxu0 0
    %389 = vmatpush2.bf16.msra.mxu0 0
    %390 = vmatprep.subr.bf16.mxu0 0
    %391 = vmatpush2.bf16.msra.mxu0 0
    %392 = vmatprep.subr.bf16.mxu0 0
    %393 = vmatpush2.bf16.msra.mxu0 0
    %394 = vmatprep.subr.bf16.mxu0 0
    %395 = vmatpush2.bf16.msra.mxu0 0
    %396 = vmatprep.subr.bf16.mxu0 0
    %397 = vmatpush2.bf16.msra.mxu0 0
    %398 = vmatprep.mubr.bf16.mxu0 0
    %399 = vmatmul.mubr.bf16.gmra.mxu0 %v364
    %v400 = vpop.f32.mrf.mxu0
    %v401 = vadd.f32 %v24, %v400
    %v402 = vpop.f32.mrf.mxu0
    %v403 = vpop.f32.mrf.mxu0
    %v404 = vadd.f32 %v25, %v403
    %v405 = vpop.f32.mrf.mxu0
    %406 = vdwg.mxu0
    %vm407 = vcmask 523264
    %v408 = vsel %vm407, %v401, -inf
    %409 = vmax.xlane.f32.xlu0 %v408
    %v410 = vpop.xlane.xlu0 %409
    %v411 = vsel %vm407, %v404, -inf
    %412 = vmax.xlane.f32.xlu0 %v411
    %v413 = vpop.xlane.xlu0 %412
    %v414 = vsub.f32 %v401, %v410
    %v415 = vsub.f32 %v404, %v413
    %v416 = vmul.f32 %v414, 1.442695
    %v417 = vpow.pop %v416
    %v418 = vmul.f32 %v415, 1.442695
    %v419 = vpow.pop %v418
    %v420 = vpack.c.bf16 %v419, %v417
    %v421 = vmul.f32 %v252, %v262
    %v422 = vmul.f32 %v255, %v263
    %v423 = vmul.f32 %v252, %v264
    %v424 = vmul.f32 %v255, %v265
    %v425 = vmul.f32 %v252, %v266
    %v426 = vmul.f32 %v255, %v267
    %v427 = vmul.f32 %v252, %v268
    %v428 = vmul.f32 %v255, %v269
    %v429 = vpack.c.bf16 %v422, %v421
    %v430 = vpack.c.bf16 %v424, %v423
    %v431 = vpack.c.bf16 %v426, %v425
    %v432 = vpack.c.bf16 %v428, %v427
    %v434 = vsel %vm407, %v420, 0
    %436 = vmatprep.subr.bf16.mxu0 0
    %437 = vmatpush1.bf16.msra.mxu0 0
    %438 = vmatprep.subr.bf16.mxu0 0
    %439 = vmatpush1.bf16.msra.mxu0 0
    %440 = vmatprep.subr.bf16.mxu0 0
    %441 = vmatpush1.bf16.msra.mxu0 0
    %442 = vmatprep.subr.bf16.mxu0 0
    %443 = vmatpush1.bf16.msra.mxu0 0
    %444 = vmatprep.subr.bf16.mxu0 0
    %445 = vmatpush1.bf16.msra.mxu0 %v432
    %446 = vmatprep.subr.bf16.mxu0 0
    %447 = vmatpush1.bf16.msra.mxu0 %v431
    %448 = vmatprep.subr.bf16.mxu0 0
    %449 = vmatpush1.bf16.msra.mxu0 %v430
    %450 = vmatprep.subr.bf16.mxu0 0
    %451 = vmatpush1.bf16.msra.mxu0 %v429
    %452 = vmatprep.subr.bf16.mxu0 0
    %453 = vmatpush2.bf16.msra.mxu0 0
    %454 = vmatprep.subr.bf16.mxu0 0
    %455 = vmatpush2.bf16.msra.mxu0 0
    %456 = vmatprep.subr.bf16.mxu0 0
    %457 = vmatpush2.bf16.msra.mxu0 0
    %458 = vmatprep.subr.bf16.mxu0 0
    %459 = vmatpush2.bf16.msra.mxu0 0
    %460 = vmatprep.subr.bf16.mxu0 0
    %461 = vmatpush2.bf16.msra.mxu0 0
    %462 = vmatprep.subr.bf16.mxu0 0
    %463 = vmatpush2.bf16.msra.mxu0 0
    %464 = vmatprep.subr.bf16.mxu0 0
    %465 = vmatpush2.bf16.msra.mxu0 0
    %466 = vmatprep.subr.bf16.mxu0 0
    %467 = vmatpush2.bf16.msra.mxu0 0
    %468 = vmatprep.mubr.bf16.mxu0 0
    %469 = vmatmul.mubr.bf16.gmra.mxu0 %v434
    %v470 = vpop.f32.mrf.mxu0
    %v471 = vadd.f32 0.0, %v470
    %v472 = vpop.f32.mrf.mxu0
    %v473 = vpop.f32.mrf.mxu0
    %v474 = vadd.f32 0.0, %v473
    %v475 = vpop.f32.mrf.mxu0
    %476 = vdwg.mxu0
    %v477 = vpack.c.bf16 %v263, %v262
    %v478 = vpack.c.bf16 %v265, %v264
    %v479 = vpack.c.bf16 %v267, %v266
    %v480 = vpack.c.bf16 %v269, %v268
    %481 = vmatprep.subr.bf16.mxu0 0
    %482 = vmatpush1.bf16.msra.mxu0 0
    %483 = vmatprep.subr.bf16.mxu0 0
    %484 = vmatpush1.bf16.msra.mxu0 0
    %485 = vmatprep.subr.bf16.mxu0 0
    %486 = vmatpush1.bf16.msra.mxu0 0
    %487 = vmatprep.subr.bf16.mxu0 0
    %488 = vmatpush1.bf16.msra.mxu0 0
    %489 = vmatprep.subr.bf16.mxu0 0
    %490 = vmatpush1.bf16.msra.mxu0 %v480
    %491 = vmatprep.subr.bf16.mxu0 0
    %492 = vmatpush1.bf16.msra.mxu0 %v479
    %493 = vmatprep.subr.bf16.mxu0 0
    %494 = vmatpush1.bf16.msra.mxu0 %v478
    %495 = vmatprep.subr.bf16.mxu0 0
    %496 = vmatpush1.bf16.msra.mxu0 %v477
    %497 = vmatprep.subr.bf16.mxu0 0
    %498 = vmatpush2.bf16.msra.mxu0 0
    %499 = vmatprep.subr.bf16.mxu0 0
    %500 = vmatpush2.bf16.msra.mxu0 0
    %501 = vmatprep.subr.bf16.mxu0 0
    %502 = vmatpush2.bf16.msra.mxu0 0
    %503 = vmatprep.subr.bf16.mxu0 0
    %504 = vmatpush2.bf16.msra.mxu0 0
    %505 = vmatprep.subr.bf16.mxu0 0
    %506 = vmatpush2.bf16.msra.mxu0 0
    %507 = vmatprep.subr.bf16.mxu0 0
    %508 = vmatpush2.bf16.msra.mxu0 0
    %509 = vmatprep.subr.bf16.mxu0 0
    %510 = vmatpush2.bf16.msra.mxu0 0
    %511 = vmatprep.subr.bf16.mxu0 0
    %512 = vmatpush2.bf16.msra.mxu0 0
    %513 = vmatprep.mubr.bf16.mxu0 0
    %514 = vmatmul.mubr.bf16.gmra.mxu0 %v434
    %v515 = vpop.f32.mrf.mxu0
    %v516 = vadd.f32 0.0, %v515
    %v517 = vpop.f32.mrf.mxu0
    %v518 = vpop.f32.mrf.mxu0
    %v519 = vadd.f32 0.0, %v518
    %v520 = vpop.f32.mrf.mxu0
    %521 = vdwg.mxu0
    %v522 = vrcp.pop %v516
    %v523 = vrcp.pop %v519
    %v524 = vmul.f32 %v471, %v522
    %v525 = vmul.f32 %v474, %v523
    %v526 = vpack.c.bf16 %v525, %v524
    %v527 = vld [vmem:[%s2 + $0x30] sm:$0xf]
    %v528 = vld [vmem:[%s2 + $0x34] sm:$0xf]
    %v529 = vld [vmem:[%s2 + $0x38] sm:$0xf]
    %v530 = vld [vmem:[%s2 + $0x3c] sm:$0xf]
    %v531 = vld [vmem:[%s4 + $0x3] sm:$0x1]
    %v532 = vlaneseq
    %v533 = vshrl.u32 %v532, 7
    %v534 = vsub.s32 0, %v533
    %v535 = vrot.slane %v531, %v534
    %v540 = vunpack.c.l.b16 %v527
    %v541 = vunpack.c.l.b16 %v528
    %v542 = vunpack.c.l.b16 %v529
    %v543 = vunpack.c.l.b16 %v530
    %v544 = vpack.c.b16 %v541, %v540
    %v545 = vpack.c.b16 %v543, %v542
    %v549 = vsel %vm26, %v526, 0
    %551 = vmatprep.subr.bf16.mxu0 0
    %552 = vmatpush1.bf16.msra.mxu0 0
    %553 = vmatprep.subr.bf16.mxu0 0
    %554 = vmatpush1.bf16.msra.mxu0 0
    %555 = vmatprep.subr.bf16.mxu0 0
    %556 = vmatpush1.bf16.msra.mxu0 0
    %557 = vmatprep.subr.bf16.mxu0 0
    %558 = vmatpush1.bf16.msra.mxu0 0
    %559 = vmatprep.subr.bf16.mxu0 0
    %560 = vmatpush1.bf16.msra.mxu0 0
    %561 = vmatprep.subr.bf16.mxu0 0
    %562 = vmatpush1.bf16.msra.mxu0 0
    %563 = vmatprep.subr.bf16.mxu0 0
    %564 = vmatpush1.bf16.msra.mxu0 %v545
    %565 = vmatprep.subr.bf16.mxu0 0
    %566 = vmatpush1.bf16.msra.mxu0 %v544
    %567 = vmatprep.subr.bf16.mxu0 0
    %568 = vmatpush2.bf16.msra.mxu0 0
    %569 = vmatprep.subr.bf16.mxu0 0
    %570 = vmatpush2.bf16.msra.mxu0 0
    %571 = vmatprep.subr.bf16.mxu0 0
    %572 = vmatpush2.bf16.msra.mxu0 0
    %573 = vmatprep.subr.bf16.mxu0 0
    %574 = vmatpush2.bf16.msra.mxu0 0
    %575 = vmatprep.subr.bf16.mxu0 0
    %576 = vmatpush2.bf16.msra.mxu0 0
    %577 = vmatprep.subr.bf16.mxu0 0
    %578 = vmatpush2.bf16.msra.mxu0 0
    %579 = vmatprep.subr.bf16.mxu0 0
    %580 = vmatpush2.bf16.msra.mxu0 0
    %581 = vmatprep.subr.bf16.mxu0 0
    %582 = vmatpush2.bf16.msra.mxu0 0
    %583 = vmatprep.mubr.bf16.mxu0 0
    %584 = vmatmul.mubr.bf16.gmra.mxu0 %v549
    %v585 = vpop.f32.mrf.mxu0
    %v586 = vadd.f32 %v535, %v585
    %v587 = vpop.f32.mrf.mxu0
    %v588 = vpop.f32.mrf.mxu0
    %v589 = vadd.f32 %v535, %v588
    %v590 = vpop.f32.mrf.mxu0
    %591 = vdwg.mxu0
    %v592 = vadd.f32 %v586, %v66
    %v593 = vadd.f32 %v589, %v67
    %v594 = vsel %vm26, %v592, 0.0
    %595 = vadd.xlane.f32.xlu0 %v594
    %v596 = vpop.xlane.xlu0 %595
    %v597 = vsel %vm26, %v593, 0.0
    %598 = vadd.xlane.f32.xlu0 %v597
    %v599 = vpop.xlane.xlu0 %598
    %v600 = vmul.f32 %v596, %v33
    %v601 = vmul.f32 %v599, %v33
    %v602 = vsub.f32 %v592, %v600
    %v603 = vsub.f32 %v593, %v601
    %v604 = vmul.f32 %v602, %v602
    %v605 = vmul.f32 %v603, %v603
    %v606 = vsel %vm26, %v604, 0.0
    %607 = vadd.xlane.f32.xlu0 %v606
    %v608 = vpop.xlane.xlu0 %607
    %v609 = vsel %vm26, %v605, 0.0
    %610 = vadd.xlane.f32.xlu0 %v609
    %v611 = vpop.xlane.xlu0 %610
    %v612 = vmul.f32 %v608, %v33
    %v613 = vmul.f32 %v611, %v33
    %v614 = vadd.f32 %v612, 1e-06
    %v615 = vadd.f32 %v613, 1e-06
    %v616 = vrsqrt.pop %v614
    %v617 = vrsqrt.pop %v615
    %v618 = vmul.f32 %v602, %v616
    %v619 = vmul.f32 %v603, %v617
    %v620 = vld [vmem:[%s4 + $0x8] sm:$0x1]
    %v621 = vlaneseq
    %v622 = vshrl.u32 %v621, 7
    %v623 = vsub.s32 0, %v622
    %v624 = vrot.slane %v620, %v623
    %v625 = vmul.f32 %v618, %v624
    %v626 = vmul.f32 %v619, %v624
    %v627 = vld [vmem:[%s4 + $0x9] sm:$0x1]
    %v628 = vlaneseq
    %v629 = vshrl.u32 %v628, 7
    %v630 = vsub.s32 0, %v629
    %v631 = vrot.slane %v627, %v630
    %v632 = vadd.f32 %v625, %v631
    %v633 = vadd.f32 %v626, %v631
    %v634 = vpack.c.bf16 %v633, %v632
    %v635 = vld [vmem:[%s3] sm:$0xf]
    %v636 = vld [vmem:[%s3 + $0x4] sm:$0xf]
    %v637 = vld [vmem:[%s3 + $0x8] sm:$0xf]
    %v638 = vld [vmem:[%s3 + $0xc] sm:$0xf]
    %v639 = vld [vmem:[%s4 + $0x4] sm:$0x1]
    %v640 = vlaneseq
    %v641 = vshrl.u32 %v640, 7
    %v642 = vsub.s32 0, %v641
    %v643 = vrot.slane %v639, %v642
    %v648 = vunpack.c.l.b16 %v635
    %v649 = vunpack.c.l.b16 %v636
    %v650 = vunpack.c.l.b16 %v637
    %v651 = vunpack.c.l.b16 %v638
    %v652 = vpack.c.b16 %v649, %v648
    %v653 = vpack.c.b16 %v651, %v650
    %v657 = vsel %vm26, %v634, 0
    %659 = vmatprep.subr.bf16.mxu0 0
    %660 = vmatpush1.bf16.msra.mxu0 0
    %661 = vmatprep.subr.bf16.mxu0 0
    %662 = vmatpush1.bf16.msra.mxu0 0
    %663 = vmatprep.subr.bf16.mxu0 0
    %664 = vmatpush1.bf16.msra.mxu0 0
    %665 = vmatprep.subr.bf16.mxu0 0
    %666 = vmatpush1.bf16.msra.mxu0 0
    %667 = vmatprep.subr.bf16.mxu0 0
    %668 = vmatpush1.bf16.msra.mxu0 0
    %669 = vmatprep.subr.bf16.mxu0 0
    %670 = vmatpush1.bf16.msra.mxu0 0
    %671 = vmatprep.subr.bf16.mxu0 0
    %672 = vmatpush1.bf16.msra.mxu0 %v653
    %673 = vmatprep.subr.bf16.mxu0 0
    %674 = vmatpush1.bf16.msra.mxu0 %v652
    %675 = vmatprep.subr.bf16.mxu0 0
    %676 = vmatpush2.bf16.msra.mxu0 0
    %677 = vmatprep.subr.bf16.mxu0 0
    %678 = vmatpush2.bf16.msra.mxu0 0
    %679 = vmatprep.subr.bf16.mxu0 0
    %680 = vmatpush2.bf16.msra.mxu0 0
    %681 = vmatprep.subr.bf16.mxu0 0
    %682 = vmatpush2.bf16.msra.mxu0 0
    %683 = vmatprep.subr.bf16.mxu0 0
    %684 = vmatpush2.bf16.msra.mxu0 0
    %685 = vmatprep.subr.bf16.mxu0 0
    %686 = vmatpush2.bf16.msra.mxu0 0
    %687 = vmatprep.subr.bf16.mxu0 0
    %688 = vmatpush2.bf16.msra.mxu0 0
    %689 = vmatprep.subr.bf16.mxu0 0
    %690 = vmatpush2.bf16.msra.mxu0 0
    %691 = vmatprep.mubr.bf16.mxu0 0
    %692 = vmatmul.mubr.bf16.gmra.mxu0 %v657
    %v693 = vpop.f32.mrf.mxu0
    %v694 = vadd.f32 %v643, %v693
    %v695 = vpop.f32.mrf.mxu0
    %v696 = vpop.f32.mrf.mxu0
    %v697 = vadd.f32 %v643, %v696
    %v698 = vpop.f32.mrf.mxu0
    %699 = vdwg.mxu0
    %v700 = vmax.f32 %v694, 0.0
    %v701 = vmax.f32 %v697, 0.0
    %v702 = vpack.c.bf16 %v701, %v700
    %v703 = vld [vmem:[%s3 + $0x10] sm:$0xf]
    %v704 = vld [vmem:[%s3 + $0x14] sm:$0xf]
    %v705 = vld [vmem:[%s3 + $0x18] sm:$0xf]
    %v706 = vld [vmem:[%s3 + $0x1c] sm:$0xf]
    %v707 = vld [vmem:[%s3 + $0x20] sm:$0xf]
    %v708 = vld [vmem:[%s3 + $0x24] sm:$0xf]
    %v709 = vld [vmem:[%s3 + $0x28] sm:$0xf]
    %v710 = vld [vmem:[%s3 + $0x2c] sm:$0xf]
    %v711 = vld [vmem:[%s4 + $0x5] sm:$0x1]
    %v712 = vlaneseq
    %v713 = vshrl.u32 %v712, 7
    %v714 = vsub.s32 0, %v713
    %v715 = vrot.slane %v711, %v714
    %v724 = vunpack.c.l.b16 %v703
    %v725 = vunpack.c.l.b16 %v704
    %v726 = vunpack.c.l.b16 %v705
    %v727 = vunpack.c.l.b16 %v706
    %v728 = vunpack.c.l.b16 %v707
    %v729 = vunpack.c.l.b16 %v708
    %v730 = vunpack.c.l.b16 %v709
    %v731 = vunpack.c.l.b16 %v710
    %v732 = vpack.c.b16 %v725, %v724
    %v733 = vpack.c.b16 %v727, %v726
    %v734 = vpack.c.b16 %v729, %v728
    %v735 = vpack.c.b16 %v731, %v730
    %v741 = vsel %vm407, %v702, 0
    %743 = vmatprep.subr.bf16.mxu0 0
    %744 = vmatpush1.bf16.msra.mxu0 0
    %745 = vmatprep.subr.bf16.mxu0 0
    %746 = vmatpush1.bf16.msra.mxu0 0
    %747 = vmatprep.subr.bf16.mxu0 0
    %748 = vmatpush1.bf16.msra.mxu0 0
    %749 = vmatprep.subr.bf16.mxu0 0
    %750 = vmatpush1.bf16.msra.mxu0 0
    %751 = vmatprep.subr.bf16.mxu0 0
    %752 = vmatpush1.bf16.msra.mxu0 %v735
    %753 = vmatprep.subr.bf16.mxu0 0
    %754 = vmatpush1.bf16.msra.mxu0 %v734
    %755 = vmatprep.subr.bf16.mxu0 0
    %756 = vmatpush1.bf16.msra.mxu0 %v733
    %757 = vmatprep.subr.bf16.mxu0 0
    %758 = vmatpush1.bf16.msra.mxu0 %v732
    %759 = vmatprep.subr.bf16.mxu0 0
    %760 = vmatpush2.bf16.msra.mxu0 0
    %761 = vmatprep.subr.bf16.mxu0 0
    %762 = vmatpush2.bf16.msra.mxu0 0
    %763 = vmatprep.subr.bf16.mxu0 0
    %764 = vmatpush2.bf16.msra.mxu0 0
    %765 = vmatprep.subr.bf16.mxu0 0
    %766 = vmatpush2.bf16.msra.mxu0 0
    %767 = vmatprep.subr.bf16.mxu0 0
    %768 = vmatpush2.bf16.msra.mxu0 0
    %769 = vmatprep.subr.bf16.mxu0 0
    %770 = vmatpush2.bf16.msra.mxu0 0
    %771 = vmatprep.subr.bf16.mxu0 0
    %772 = vmatpush2.bf16.msra.mxu0 0
    %773 = vmatprep.subr.bf16.mxu0 0
    %774 = vmatpush2.bf16.msra.mxu0 0
    %775 = vmatprep.mubr.bf16.mxu0 0
    %776 = vmatmul.mubr.bf16.gmra.mxu0 %v741
    %v777 = vpop.f32.mrf.mxu0
    %v778 = vadd.f32 %v715, %v777
    %v779 = vpop.f32.mrf.mxu0
    %v780 = vpop.f32.mrf.mxu0
    %v781 = vadd.f32 %v715, %v780
    %v782 = vpop.f32.mrf.mxu0
    %783 = vdwg.mxu0
    %v784 = vadd.f32 %v778, %v632
    %v785 = vadd.f32 %v781, %v633
    %v786 = vsel %vm26, %v784, 0.0
    %787 = vadd.xlane.f32.xlu0 %v786
    %v788 = vpop.xlane.xlu0 %787
    %v789 = vsel %vm26, %v785, 0.0
    %790 = vadd.xlane.f32.xlu0 %v789
    %v791 = vpop.xlane.xlu0 %790
    %v792 = vmul.f32 %v788, %v33
    %v793 = vmul.f32 %v791, %v33
    %v794 = vsub.f32 %v784, %v792
    %v795 = vsub.f32 %v785, %v793
    %v796 = vmul.f32 %v794, %v794
    %v797 = vmul.f32 %v795, %v795
    %v798 = vsel %vm26, %v796, 0.0
    %799 = vadd.xlane.f32.xlu0 %v798
    %v800 = vpop.xlane.xlu0 %799
    %v801 = vsel %vm26, %v797, 0.0
    %802 = vadd.xlane.f32.xlu0 %v801
    %v803 = vpop.xlane.xlu0 %802
    %v804 = vmul.f32 %v800, %v33
    %v805 = vmul.f32 %v803, %v33
    %v806 = vadd.f32 %v804, 1e-06
    %v807 = vadd.f32 %v805, 1e-06
    %v808 = vrsqrt.pop %v806
    %v809 = vrsqrt.pop %v807
    %v810 = vmul.f32 %v794, %v808
    %v811 = vmul.f32 %v795, %v809
    %v812 = vld [vmem:[%s4 + $0xa] sm:$0x1]
    %v813 = vlaneseq
    %v814 = vshrl.u32 %v813, 7
    %v815 = vsub.s32 0, %v814
    %v816 = vrot.slane %v812, %v815
    %v817 = vmul.f32 %v810, %v816
    %v818 = vmul.f32 %v811, %v816
    %v819 = vld [vmem:[%s4 + $0xb] sm:$0x1]
    %v820 = vlaneseq
    %v821 = vshrl.u32 %v820, 7
    %v822 = vsub.s32 0, %v821
    %v823 = vrot.slane %v819, %v822
    %v824 = vadd.f32 %v817, %v823
    %v825 = vadd.f32 %v818, %v823
    %826 = vst.msk [vmem:[#allocation2] sm:$0xff] %vm26, %v824
    %827 = vst.msk [vmem:[#allocation2 + $0x8] sm:$0xff] %vm26, %v825
    // Predicated region
    $region22: #{tpu_custom_call.1} parent=1 // pred_check
      _
    $region23: #{tpu_custom_call.1} parent=1 // pred_check_branch
      %829 = sbr.rel (0) target = $region25
    $region24: #{tpu_custom_call.1} parent=1 // pred_region
      %s831 = ssub.s32 256, 256
      %832 = vsyncadd [#allocation3], %s831
      %s833 = sshll.u32 [#allocation2], 4
      %s834 = int_to_ptr.vmem [resolvable:$true] %s833
      %839 = dma.vmem_to_hbm [thread:$0]  %s834, 256, %s5, [#allocation3], 128, 128, 8
    $region25: #{tpu_custom_call.1} parent=1 // pred_fallthru
      _
    // Predicated region
    $region26: #{tpu_custom_call.1} parent=1 // pred_check
      _
    $region27: #{tpu_custom_call.1} parent=1 // pred_check_branch
      %841 = sbr.rel (0) target = $region29
    $region28: #{tpu_custom_call.1} parent=1 // pred_region
      %842 = dma.done [#allocation3], 256
    $region29: #{tpu_custom_call.1} parent=1 // pred_fallthru
      _
    %843 = vsyncpa [#allocation3], 1

</llo_original>
